<compile_context>
chip_gen: v7x
topology: tpu7x:2x2x1
jax: 0.10.0
libtpu: 0.0.40
codegen_flags: <defaults>
</compile_context>

<pallas_src>
import jax
import jax.numpy as jnp
from jax.experimental import pallas as pl
from jax.experimental.pallas import tpu as pltpu


def _item_attention_kernel(his_ref, out_ref):
    """his_ref: (tn, 3*D) f32 tile; out_ref: (tn, D) f32 tile.

    out = his[:, 0:D] + his[:, D:2D] + his[:, 2D:3D]
    (the attention scores of the original module are identically 1.0).
    """
    D = out_ref.shape[-1]
    a = his_ref[:, 0 * D:1 * D]
    b = his_ref[:, 1 * D:2 * D]
    c = his_ref[:, 2 * D:3 * D]
    out_ref[...] = a + b + c


def item_attention(his_outfit_encode, user_id, weight, bias, *, eb_size,
                   block_rows=1024):
    """Pallas implementation of ItemAttention.forward.

    his_outfit_encode: (B, T, 3, 2*eb_size) f32
    user_id:           (B, 16) f32            (dead input — see header note)
    weight:            (1, 2*eb_size + 16)    (dead input — see header note)
    bias:              (1,)                   (dead input — see header note)
    returns:           (B, T, 1, 2*eb_size) f32
    """
    del user_id, weight, bias  # softmax over a singleton dim == 1.0 -> no effect
    assert block_rows % 8 == 0
    B, T, K, D = his_outfit_encode.shape
    assert K == 3 and D == 2 * eb_size
    N = B * T

    # Lane-dense (N, 3*D) view of the history tensor.
    his_flat = his_outfit_encode.reshape(N, K * D)

    if N <= block_rows:
        tn = N              # single block; full first dim is always legal
        n_pad = 0
    else:
        tn = block_rows     # multiple of 8 (sublane) by construction
        n_pad = (-N) % tn
        if n_pad:
            his_flat = jnp.pad(his_flat, ((0, n_pad), (0, 0)))
    n_total = N + n_pad
    grid = (n_total // tn,)

    out_flat = pl.pallas_call(
        _item_attention_kernel,
        out_shape=jax.ShapeDtypeStruct((n_total, D), his_outfit_encode.dtype),
        grid=grid,
        in_specs=[pl.BlockSpec((tn, K * D), lambda i: (i, 0))],
        out_specs=pl.BlockSpec((tn, D), lambda i: (i, 0)),
        compiler_params=pltpu.CompilerParams(
            dimension_semantics=("parallel",)),
    )(his_flat)

    return out_flat[:N].reshape(B, T, 1, D)


def item_attention_ref(his_outfit_encode, user_id, weight, bias, *, eb_size):
    """Pure-JAX transliteration of the PyTorch forward (for verification)."""
    B, T, K, D = his_outfit_encode.shape
    his_outfit = his_outfit_encode.reshape(-1, 3, D)
    uid_tile = jnp.tile(user_id, (1, 3 * T)).reshape(-1, 3, 16)
    query = jnp.concatenate([his_outfit, uid_tile], axis=-1)
    logits = query @ weight.T + bias                     # (N, 3, 1)
    atten = jax.nn.softmax(logits, axis=-1).reshape(-1, 1, 3)
    score = atten.reshape(-1, T, 1, 3)
    return jnp.matmul(score, his_outfit_encode)


if __name__ == "__main__":
    def _run_and_check(B, T, eb_size, key):
        D = 2 * eb_size
        k1, k2, k3, k4 = jax.random.split(key, 4)
        his = jax.random.normal(k1, (B, T, 3, D), dtype=jnp.float32)
        uid = jax.random.normal(k2, (B, 16), dtype=jnp.float32)
        weight = 0.1 * jax.random.normal(k3, (1, D + 16), dtype=jnp.float32)
        bias = 0.1 * jax.random.normal(k4, (1,), dtype=jnp.float32)

        out = item_attention(his, uid, weight, bias, eb_size=eb_size)
        out = jax.block_until_ready(out)
        ref = item_attention_ref(his, uid, weight, bias, eb_size=eb_size)
        assert out.shape == (B, T, 1, D)
        assert jnp.allclose(out, ref, atol=1e-5, rtol=1e-5), "mismatch vs reference"

    key = jax.random.PRNGKey(0)
    k_small, k_big = jax.random.split(key)
    # Small shape at the module's default eb_size=128 (D=256).
    _run_and_check(B=2, T=4, eb_size=128, key=k_small)
    # Multi-block + padded-tail path: N = 2100 rows -> 3 grid steps of 1024.
    _run_and_check(B=3, T=700, eb_size=128, key=k_big)

    print("KERNEL_OK")
</pallas_src>

<mosaic_0001>
module attributes {stable_mosaic.version = 11 : i64} {
  func.func @_item_attention_kernel(%arg0: i32, %arg1: memref<8x768xf32, #tpu.memory_space<vmem>>, %arg2: memref<8x256xf32, #tpu.memory_space<vmem>>) attributes {dimension_semantics = [#tpu.dimension_semantics<parallel>], iteration_bounds = array<i64: 1>, scalar_prefetch = 0 : i64, scratch_operands = 0 : i64, tpu.core_type = #tpu.core_type<tc>, window_params = [{transform_indices = @transform_0, window_bounds = array<i64: 8, 768>}, {transform_indices = @transform_1, window_bounds = array<i64: 8, 256>}]} {
    %c0 = arith.constant 0 : index
    %c0_0 = arith.constant 0 : index
    %0 = vector.load %arg1[%c0, %c0_0] : memref<8x768xf32, #tpu.memory_space<vmem>>, vector<8x256xf32>
    %c0_1 = arith.constant 0 : index
    %c256 = arith.constant 256 : index
    %1 = vector.load %arg1[%c0_1, %c256] : memref<8x768xf32, #tpu.memory_space<vmem>>, vector<8x256xf32>
    %c0_2 = arith.constant 0 : index
    %c512 = arith.constant 512 : index
    %2 = vector.load %arg1[%c0_2, %c512] : memref<8x768xf32, #tpu.memory_space<vmem>>, vector<8x256xf32>
    %3 = arith.addf %0, %1 : vector<8x256xf32>
    %4 = arith.addf %3, %2 : vector<8x256xf32>
    %c0_3 = arith.constant 0 : index
    %c0_4 = arith.constant 0 : index
    %5 = vector.load %arg2[%c0_3, %c0_4] : memref<8x256xf32, #tpu.memory_space<vmem>>, vector<8x256xf32>
    tpu.vector_store %arg2[%c0_3, %c0_4], %4 {strides = array<i32>} : memref<8x256xf32, #tpu.memory_space<vmem>>, vector<8x256xf32>,
    return
  }
  func.func @transform_0(%arg0: i32) -> (i32, i32) {
    %c0_i32 = arith.constant 0 : i32
    %c0_i32_0 = arith.constant 0 : i32
    return %arg0, %c0_i32 : i32, i32
  }
  func.func @transform_1(%arg0: i32) -> (i32, i32) {
    %c0_i32 = arith.constant 0 : i32
    %c0_i32_0 = arith.constant 0 : i32
    return %arg0, %c0_i32 : i32, i32
  }
}

</mosaic_0001>

<llo_original>
// kernel: tpu_custom_call.1
$region0: #{tpu_custom_call.1}
  #allocation0 [shape = 'u32[]', space=smem, size = 0x4, offset = 0x4, fixed_abs, tag = 'smem constant byte address 0x4 - core index']
  #allocation1 [shape = 'u32[144,128]{1,0:T(1,128)}', space=vmem, size = 0x12000, scoped, tag = 'internal scratch']
  %s0 = inlined_call_operand.hbm [shape: f32[8,768], index: 0, kind: input, shape index: {}]
  %s1 = inlined_call_operand.hbm [shape: f32[8,256], index: 1, kind: output, shape index: {}]
  %s2 = sld [smem:[#allocation0]]
  $region18: #{tpu_custom_call.1} parent=0
    _
  %s4 = ssub.s32 1, %s2
  %s5 = scalar_select 0, %s4, %s2
  $region1: #{tpu_custom_call.1} parent=0
    #allocation2 [shape = 'u8[24576]{0}', space=vmem, size = 0x6000, scoped, tag = 'input window, operand 0, single buffered']
    #allocation3 [shape = 's32[1]{0}', space=sflag, size = 0x4, scoped, tag = 'scoped memory for tpu_custom_call.1']
    #allocation4 [shape = 's32[1]{0}', space=sflag, size = 0x4, scoped, tag = 'scoped memory for tpu_custom_call.1']
    #allocation5 [shape = 'u8[8192]{0}', space=vmem, size = 0x2000, scoped, tag = 'output window, operand 0, single buffered']
    %6 = vsyncpa [#allocation3], 0
    %7 = vsyncpa [#allocation4], 0
    // Predicated region
    $region2: #{tpu_custom_call.1} parent=1 // pred_check
      _
    $region3: #{tpu_custom_call.1} parent=1 // pred_check_branch
      %9 = sbr.rel (0) target = $region5
    $region4: #{tpu_custom_call.1} parent=1 // pred_region
      %s11 = ssub.s32 768, 768
      %12 = vsyncadd [#allocation3], %s11
      %s14 = sshll.u32 [#allocation2], 4
      %s15 = int_to_ptr.vmem [resolvable:$true] %s14
      %17 = dma.hbm_to_vmem [thread:$0]  %s0, 768, %s15, [#allocation3]
    $region5: #{tpu_custom_call.1} parent=1 // pred_fallthru
      _
    // Predicated region
    $region6: #{tpu_custom_call.1} parent=1 // pred_check
      _
    $region7: #{tpu_custom_call.1} parent=1 // pred_check_branch
      %19 = sbr.rel (0) target = $region9
    $region8: #{tpu_custom_call.1} parent=1 // pred_region
      %20 = dma.done [#allocation3], 768
    $region9: #{tpu_custom_call.1} parent=1 // pred_fallthru
      _
    %v21 = vld [vmem:[#allocation2] sm:$0xff]
    %v22 = vld [vmem:[#allocation2 + $0x8] sm:$0xff]
    %v23 = vld [vmem:[#allocation2 + $0x10] sm:$0xff]
    %v24 = vld [vmem:[#allocation2 + $0x18] sm:$0xff]
    %v25 = vld [vmem:[#allocation2 + $0x20] sm:$0xff]
    %v26 = vld [vmem:[#allocation2 + $0x28] sm:$0xff]
    %v27 = vadd.f32 %v21, %v23
    %v28 = vadd.f32 %v22, %v24
    %v29 = vadd.f32 %v27, %v25
    %v30 = vadd.f32 %v28, %v26
    %31 = vst [vmem:[#allocation5] sm:$0xff] %v29
    %32 = vst [vmem:[#allocation5 + $0x8] sm:$0xff] %v30
    // Predicated region
    $region10: #{tpu_custom_call.1} parent=1 // pred_check
      _
    $region11: #{tpu_custom_call.1} parent=1 // pred_check_branch
      %34 = sbr.rel (0) target = $region13
    $region12: #{tpu_custom_call.1} parent=1 // pred_region
      %s36 = ssub.s32 256, 256
      %37 = vsyncadd [#allocation4], %s36
      %s39 = sshll.u32 [#allocation5], 4
      %s40 = int_to_ptr.vmem [resolvable:$true] %s39
      %42 = dma.vmem_to_hbm [thread:$0]  %s40, 256, %s1, [#allocation4]
    $region13: #{tpu_custom_call.1} parent=1 // pred_fallthru
      _
    // Predicated region
    $region14: #{tpu_custom_call.1} parent=1 // pred_check
      _
    $region15: #{tpu_custom_call.1} parent=1 // pred_check_branch
      %44 = sbr.rel (0) target = $region17
    $region16: #{tpu_custom_call.1} parent=1 // pred_region
      %45 = dma.done [#allocation4], 256
    $region17: #{tpu_custom_call.1} parent=1 // pred_fallthru
      _
    %46 = vsyncpa [#allocation3], 1
    %47 = vsyncpa [#allocation4], 1

</llo_original>
